<compile_context>
chip_gen: v7x
topology: tpu7x:2x2x1
jax: 0.10.0
libtpu: 0.0.40
codegen_flags: <defaults>
</compile_context>

<pallas_src>
import functools

import jax
import jax.numpy as jnp
from jax import lax
from jax.experimental import pallas as pl
from jax.experimental.pallas import tpu as pltpu


def _round_up(x, m):
    return ((x + m - 1) // m) * m


def _choose_tile_n(d, c_pad, itemsize):
    # Per-row VMEM footprint: double-buffered input tile + f32/bf16 temps
    # (xf, hi, lo, xf^2) + one-hot + lane-padded label row (double-buffered).
    d_lane = _round_up(max(d, 1), 128)
    c_lane = _round_up(max(c_pad, 1), 128)
    per_row = (2 * d * itemsize + 4 * d_lane * 4 + 2 * c_lane * 2 + 2 * 128 * 4)
    budget = 12 * 1024 * 1024
    t = budget // max(per_row, 1)
    return int(max(256, min(2048, t)))


def _make_kernel(n, c_pad, tile_n, tiles_per_chunk, feat_dtype):
    def kernel(feat_ref, labels_ref, s_out, cnt_out, ssq_out, s_acc, cnt_acc, ssq_acc):
        p = pl.program_id(0)   # sample chunk ("parallel": split across TCs on v7x)
        i = pl.program_id(1)   # row tile within the chunk ("arbitrary": reduction)

        @pl.when(i == 0)
        def _init():
            s_acc[...] = jnp.zeros_like(s_acc)
            cnt_acc[...] = jnp.zeros_like(cnt_acc)
            ssq_acc[...] = jnp.zeros_like(ssq_acc)

        # Logical first row of this tile; rows >= n (ragged last tile / clamped
        # duplicate tile) are masked out so no host-side padding is needed.
        row0 = (p * tiles_per_chunk + i) * tile_n
        row_ids = row0 + lax.broadcasted_iota(jnp.int32, (tile_n, 1), 0)
        valid = row_ids < n                                     # (tile_n, 1)

        labels = labels_ref[...]                                # (tile_n, 1) int32
        class_ids = lax.broadcasted_iota(jnp.int32, (1, c_pad), 1)
        hits = jnp.logical_and(labels == class_ids, valid)      # (tile_n, c_pad)
        oh_f = hits.astype(jnp.float32)
        oh_b = oh_f.astype(jnp.bfloat16)                        # exact (0/1)

        x = feat_ref[...]                                       # (tile_n, d)
        xf = jnp.where(valid, x.astype(jnp.float32), 0.0)       # masked f32 view

        dims = (((0,), (0,)), ((), ()))                         # one_hot^T @ feat
        if feat_dtype == jnp.bfloat16:
            # bf16 inputs: one bf16 MXU pass, exact with f32 accumulation.
            xb = jnp.where(valid, x, jnp.zeros_like(x))
            s_upd = lax.dot_general(oh_b, xb, dims,
                                    preferred_element_type=jnp.float32)
        else:
            # f32 inputs: hi/lo bf16 split, 2 MXU passes, ~f32-accurate since the
            # other operand is an exact 0/1 one-hot.
            hi = xf.astype(jnp.bfloat16)
            lo = (xf - hi.astype(jnp.float32)).astype(jnp.bfloat16)
            s_upd = (lax.dot_general(oh_b, hi, dims,
                                     preferred_element_type=jnp.float32)
                     + lax.dot_general(oh_b, lo, dims,
                                       preferred_element_type=jnp.float32))

        s_acc[...] += s_upd                                            # (c_pad, d)
        cnt_acc[...] += jnp.sum(oh_f, axis=0, keepdims=True)           # (1, c_pad)
        ssq_acc[...] += jnp.sum(xf * xf, axis=0, keepdims=True)        # (1, d)

        @pl.when(i == pl.num_programs(1) - 1)
        def _write():
            s_out[0] = s_acc[...]
            cnt_out[0] = cnt_acc[...]
            ssq_out[0] = ssq_acc[...]

    return kernel


@functools.partial(jax.jit, static_argnums=(2,), static_argnames=("tile_n",))
def center_loss(s_feature, s_labels, n_class, *, tile_n=None):
    """Pallas TPU Center_loss forward. s_feature (n, d) float, s_labels (n,) int."""
    n, d = s_feature.shape
    n_class = int(n_class)

    feat = s_feature
    if feat.dtype not in (jnp.float32, jnp.bfloat16):
        feat = feat.astype(jnp.float32)
    itemsize = jnp.dtype(feat.dtype).itemsize
    labels2d = s_labels.astype(jnp.int32).reshape(n, 1)

    # Class dim only needs sublane (8) padding for the VMEM accumulator / outputs.
    c_pad = _round_up(max(n_class, 1), 8)

    # Row tile: biggest that fits the VMEM budget; single full-size tile when n is
    # small (block dim == full array dim is always legal).
    if tile_n is None:
        tile_n = _choose_tile_n(d, c_pad, itemsize)
    tile_n = int(tile_n)
    if tile_n >= n:
        tile_n = n
    else:
        tile_n = max(8, (tile_n // 8) * 8)

    nb = pl.cdiv(n, tile_n)                 # number of real row tiles
    num_chunks = 2 if nb >= 2 else 1        # v7x: one chunk per TensorCore
    tpc = pl.cdiv(nb, num_chunks)           # tiles per chunk

    # Block index for inputs; clamp so the (possibly) over-allocated last inner
    # step of a chunk re-reads a valid tile (its rows are fully masked in-kernel).
    def block_idx(p, i):
        return (jnp.minimum(p * tpc + i, nb - 1), 0)

    # VMEM budget (lane-padded), with slack, clamped to this chip's capacity.
    d_lane = _round_up(d, 128)
    c_lane = _round_up(c_pad, 128)
    est = (2 * tile_n * d * itemsize            # feature tile, double buffered
           + 2 * tile_n * 128 * 4               # labels tile (lane padded), x2
           + 2 * c_pad * d_lane * 4             # S accumulator + S output block
           + 4 * 8 * c_lane * 4 + 4 * 8 * d_lane * 4   # counts/sumsq acc + outputs
           + 2 * tile_n * c_lane * 2            # one-hot (bool + bf16)
           + 4 * tile_n * d_lane * 4)           # xf / hi / lo / xf^2 temps
    try:
        vmem_cap = int(pltpu.get_tpu_info().vmem_capacity_bytes)
    except Exception:
        vmem_cap = 64 * 1024 * 1024
    vmem_limit = int(min(max(int(est * 1.5), 32 * 1024 * 1024), int(0.75 * vmem_cap)))

    passes = 1 if feat.dtype == jnp.bfloat16 else 2
    cost = pl.CostEstimate(
        flops=int(passes * 2 * nb * tile_n * c_pad * d + 6 * n * d),
        transcendentals=0,
        bytes_accessed=int(n * d * itemsize + n * 4
                           + num_chunks * (c_pad * d + c_pad + d) * 4),
    )

    out_shapes = (
        jax.ShapeDtypeStruct((num_chunks, c_pad, d), jnp.float32),   # S partials
        jax.ShapeDtypeStruct((num_chunks, 1, c_pad), jnp.float32),   # count partials
        jax.ShapeDtypeStruct((num_chunks, 1, d), jnp.float32),       # sum(x^2) partials
    )
    out_specs = (
        pl.BlockSpec((1, c_pad, d), lambda p, i: (p, 0, 0)),
        pl.BlockSpec((1, 1, c_pad), lambda p, i: (p, 0, 0)),
        pl.BlockSpec((1, 1, d), lambda p, i: (p, 0, 0)),
    )

    s_parts, cnt_parts, ssq_parts = pl.pallas_call(
        _make_kernel(n, c_pad, tile_n, tpc, feat.dtype),
        out_shape=out_shapes,
        grid_spec=pltpu.PrefetchScalarGridSpec(
            num_scalar_prefetch=0,
            grid=(num_chunks, tpc),
            in_specs=[
                pl.BlockSpec((tile_n, d), block_idx),    # features (no padding)
                pl.BlockSpec((tile_n, 1), block_idx),    # labels (int32)
            ],
            out_specs=out_specs,
            scratch_shapes=[
                pltpu.VMEM((c_pad, d), jnp.float32),     # S accumulator
                pltpu.VMEM((1, c_pad), jnp.float32),     # counts accumulator
                pltpu.VMEM((1, d), jnp.float32),         # sum(x^2) accumulator
            ],
        ),
        compiler_params=pltpu.CompilerParams(
            dimension_semantics=("parallel", "arbitrary"),
            vmem_limit_bytes=vmem_limit,
        ),
        cost_estimate=cost,
    )(feat, labels2d)

    # Tiny epilogue over (n_class, d): combine per-chunk partials and finish the
    # closed form.  Padded classes have zero counts/rows and contribute nothing.
    S = s_parts.sum(axis=0)                                   # (c_pad, d)
    counts = jnp.maximum(cnt_parts.sum(axis=(0, 1)), 1.0)     # (c_pad,)
    sumsq = ssq_parts.sum()                                   # scalar
    centroid_term = jnp.sum(jnp.sum(S * S, axis=1) / counts)
    return (sumsq - centroid_term) * jnp.float32(1.0 / float(n * d))


def center_loss_ref(s_feature, s_labels, n_class):
    """Pure-JAX f32 reference mirroring the PyTorch forward (direct formulation)."""
    x = s_feature.astype(jnp.float32)
    one_hot = jax.nn.one_hot(s_labels, n_class, dtype=jnp.float32)       # (n, C)
    counts = jnp.maximum(one_hot.sum(axis=0), 1.0)                       # (C,)
    s_sum = jnp.zeros((n_class, x.shape[1]), jnp.float32).at[s_labels].add(x)
    centroid = s_sum / counts[:, None]                                   # (C, d)
    return jnp.mean((centroid[s_labels] - x) ** 2)


if __name__ == "__main__":
    key = jax.random.PRNGKey(0)
    k1, k2, k3, k4, k5, k6 = jax.random.split(key, 6)

    # Case 1: original small shape (single tile, single chunk, f32).
    n, d, n_class = 8, 32, 4
    s_feature = jax.random.normal(k1, (n, d), dtype=jnp.float32)
    s_labels = jax.random.randint(k2, (n,), 0, n_class, dtype=jnp.int32)
    loss = jax.block_until_ready(center_loss(s_feature, s_labels, n_class))
    ref = center_loss_ref(s_feature, s_labels, n_class)
    assert jnp.allclose(loss, ref, rtol=1e-5, atol=1e-5), (loss, ref)

    # Case 2: multi-tile, 2 parallel chunks with uneven split (exercises the
    # clamped duplicate tile, ragged-last-tile masking, and partial combine).
    n, d, n_class = 40, 96, 10
    s_feature = jax.random.normal(k3, (n, d), dtype=jnp.float32)
    s_labels = jax.random.randint(k4, (n,), 0, n_class, dtype=jnp.int32)
    loss = jax.block_until_ready(center_loss(s_feature, s_labels, n_class, tile_n=16))
    ref = center_loss_ref(s_feature, s_labels, n_class)
    assert jnp.allclose(loss, ref, rtol=1e-5, atol=1e-5), (loss, ref)

    # Case 3: bf16 features streamed without upcast, default tile selection.
    n, d, n_class = 1000, 64, 7
    s_feature = jax.random.normal(k5, (n, d), dtype=jnp.float32).astype(jnp.bfloat16)
    s_labels = jax.random.randint(k6, (n,), 0, n_class, dtype=jnp.int32)
    loss = jax.block_until_ready(center_loss(s_feature, s_labels, n_class))
    ref = center_loss_ref(s_feature, s_labels, n_class)
    assert jnp.allclose(loss, ref, rtol=1e-5, atol=1e-5), (loss, ref)

    print("KERNEL_OK")
</pallas_src>

<mosaic_0001>
module attributes {stable_mosaic.version = 11 : i64} {
  func.func @kernel(%arg0: i32, %arg1: i32, %arg2: memref<8x32xf32, #tpu.memory_space<vmem>>, %arg3: memref<8x1xi32, #tpu.memory_space<vmem>>, %arg4: memref<1x8x32xf32, #tpu.memory_space<vmem>>, %arg5: memref<1x1x8xf32, #tpu.memory_space<vmem>>, %arg6: memref<1x1x32xf32, #tpu.memory_space<vmem>>, %arg7: memref<8x32xf32, #tpu.memory_space<vmem>>, %arg8: memref<1x8xf32, #tpu.memory_space<vmem>>, %arg9: memref<1x32xf32, #tpu.memory_space<vmem>>) attributes {dimension_semantics = [#tpu.dimension_semantics<parallel>, #tpu.dimension_semantics<arbitrary>], iteration_bounds = array<i64: 1, 1>, scalar_prefetch = 0 : i64, scratch_operands = 3 : i64, tpu.core_type = #tpu.core_type<tc>, window_params = [{transform_indices = @transform_0, window_bounds = array<i64: 8, 32>}, {transform_indices = @transform_1, window_bounds = array<i64: 8, 1>}, {transform_indices = @transform_2, window_bounds = array<i64: 1, 8, 32>}, {transform_indices = @transform_3, window_bounds = array<i64: 1, 1, 8>}, {transform_indices = @transform_4, window_bounds = array<i64: 1, 1, 32>}]} {
    %c0_i32 = arith.constant 0 : i32
    %0 = arith.cmpi eq, %arg1, %c0_i32 : i32
    %1 = arith.extui %0 : i1 to i32
    %c0_i32_0 = arith.constant 0 : i32
    %2 = arith.cmpi ne, %1, %c0_i32_0 : i32
    scf.if %2 {
      %cst_23 = arith.constant 0.000000e+00 : f32
      %50 = vector.broadcast %cst_23 : f32 to vector<8x32xf32>
      %c0_24 = arith.constant 0 : index
      %c0_25 = arith.constant 0 : index
      %51 = vector.load %arg7[%c0_24, %c0_25] : memref<8x32xf32, #tpu.memory_space<vmem>>, vector<8x32xf32>
      tpu.vector_store %arg7[%c0_24, %c0_25], %50 {strides = array<i32>} : memref<8x32xf32, #tpu.memory_space<vmem>>, vector<8x32xf32>,
      %cst_26 = arith.constant 0.000000e+00 : f32
      %52 = vector.broadcast %cst_26 : f32 to vector<1x8xf32>
      %c0_27 = arith.constant 0 : index
      %c0_28 = arith.constant 0 : index
      %53 = vector.load %arg8[%c0_27, %c0_28] : memref<1x8xf32, #tpu.memory_space<vmem>>, vector<1x8xf32>
      tpu.vector_store %arg8[%c0_27, %c0_28], %52 {strides = array<i32>} : memref<1x8xf32, #tpu.memory_space<vmem>>, vector<1x8xf32>,
      %cst_29 = arith.constant 0.000000e+00 : f32
      %54 = vector.broadcast %cst_29 : f32 to vector<1x32xf32>
      %c0_30 = arith.constant 0 : index
      %c0_31 = arith.constant 0 : index
      %55 = vector.load %arg9[%c0_30, %c0_31] : memref<1x32xf32, #tpu.memory_space<vmem>>, vector<1x32xf32>
      tpu.vector_store %arg9[%c0_30, %c0_31], %54 {strides = array<i32>} : memref<1x32xf32, #tpu.memory_space<vmem>>, vector<1x32xf32>,
    } else {
    }
    %c1_i32 = arith.constant 1 : i32
    %3 = arith.muli %arg0, %c1_i32 : i32
    %4 = arith.addi %3, %arg1 : i32
    %c8_i32 = arith.constant 8 : i32
    %5 = arith.muli %4, %c8_i32 : i32
    %6 = tpu.iota {dimensions = array<i32: 0>} : vector<8x1xi32>
    %7 = vector.broadcast %5 : i32 to vector<8x1xi32>
    %8 = arith.addi %7, %6 : vector<8x1xi32>
    %c8_i32_1 = arith.constant 8 : i32
    %9 = vector.broadcast %c8_i32_1 : i32 to vector<8x1xi32>
    %10 = arith.cmpi slt, %8, %9 : vector<8x1xi32>
    %c0 = arith.constant 0 : index
    %c0_2 = arith.constant 0 : index
    %11 = vector.load %arg3[%c0, %c0_2] : memref<8x1xi32, #tpu.memory_space<vmem>>, vector<8x1xi32>
    %12 = tpu.iota {dimensions = array<i32: 1>} : vector<1x8xi32>
    %13 = vector.broadcast %11 : vector<8x1xi32> to vector<8x8xi32>
    %14 = vector.broadcast %12 : vector<1x8xi32> to vector<8x8xi32>
    %15 = arith.cmpi eq, %13, %14 : vector<8x8xi32>
    %16 = vector.broadcast %10 : vector<8x1xi1> to vector<8x8xi1>
    %17 = arith.andi %15, %16 : vector<8x8xi1>
    %18 = arith.extui %17 : vector<8x8xi1> to vector<8x8xi32>
    %19 = arith.sitofp %18 : vector<8x8xi32> to vector<8x8xf32>
    %20 = arith.truncf %19 : vector<8x8xf32> to vector<8x8xbf16>
    %c0_3 = arith.constant 0 : index
    %c0_4 = arith.constant 0 : index
    %21 = vector.load %arg2[%c0_3, %c0_4] : memref<8x32xf32, #tpu.memory_space<vmem>>, vector<8x32xf32>
    %cst = arith.constant 0.000000e+00 : f32
    %22 = vector.shape_cast %10 : vector<8x1xi1> to vector<8x1xi1>
    %23 = vector.broadcast %22 : vector<8x1xi1> to vector<8x32xi1>
    %24 = vector.broadcast %cst : f32 to vector<8x32xf32>
    %25 = arith.select %23, %21, %24 : vector<8x32xi1>, vector<8x32xf32>
    %26 = arith.truncf %25 : vector<8x32xf32> to vector<8x32xbf16>
    %27 = arith.extf %26 : vector<8x32xbf16> to vector<8x32xf32>
    %28 = arith.subf %25, %27 : vector<8x32xf32>
    %29 = arith.truncf %28 : vector<8x32xf32> to vector<8x32xbf16>
    %cst_5 = arith.constant dense<0.000000e+00> : vector<8x32xf32>
    %30 = tpu.matmul %20, %26, %cst_5 {dimension_numbers = #tpu.dot_dimension_numbers<[0], [0], [1], [1], [0, 1, 1, 1], [], []>} : vector<8x8xbf16>, vector<8x32xbf16>, vector<8x32xf32> -> vector<8x32xf32>
    %cst_6 = arith.constant dense<0.000000e+00> : vector<8x32xf32>
    %31 = tpu.matmul %20, %29, %cst_6 {dimension_numbers = #tpu.dot_dimension_numbers<[0], [0], [1], [1], [0, 1, 1, 1], [], []>} : vector<8x8xbf16>, vector<8x32xbf16>, vector<8x32xf32> -> vector<8x32xf32>
    %32 = arith.addf %30, %31 : vector<8x32xf32>
    %c0_7 = arith.constant 0 : index
    %c0_8 = arith.constant 0 : index
    %33 = vector.load %arg7[%c0_7, %c0_8] : memref<8x32xf32, #tpu.memory_space<vmem>>, vector<8x32xf32>
    %34 = arith.addf %33, %32 : vector<8x32xf32>
    %c0_9 = arith.constant 0 : index
    %c0_10 = arith.constant 0 : index
    %35 = vector.load %arg7[%c0_9, %c0_10] : memref<8x32xf32, #tpu.memory_space<vmem>>, vector<8x32xf32>
    tpu.vector_store %arg7[%c0_9, %c0_10], %34 {strides = array<i32>} : memref<8x32xf32, #tpu.memory_space<vmem>>, vector<8x32xf32>,
    %c0_11 = arith.constant 0 : index
    %c0_12 = arith.constant 0 : index
    %36 = vector.load %arg8[%c0_11, %c0_12] : memref<1x8xf32, #tpu.memory_space<vmem>>, vector<1x8xf32>
    %cst_13 = arith.constant dense<0.000000e+00> : vector<8xf32>
    %37 = vector.multi_reduction <add>, %19, %cst_13 [0] : vector<8x8xf32> to vector<8xf32>
    %38 = vector.shape_cast %37 : vector<8xf32> to vector<1x8xf32>
    %39 = arith.addf %36, %38 : vector<1x8xf32>
    %c0_14 = arith.constant 0 : index
    %c0_15 = arith.constant 0 : index
    %40 = vector.load %arg8[%c0_14, %c0_15] : memref<1x8xf32, #tpu.memory_space<vmem>>, vector<1x8xf32>
    tpu.vector_store %arg8[%c0_14, %c0_15], %39 {strides = array<i32>} : memref<1x8xf32, #tpu.memory_space<vmem>>, vector<1x8xf32>,
    %c0_16 = arith.constant 0 : index
    %c0_17 = arith.constant 0 : index
    %41 = vector.load %arg9[%c0_16, %c0_17] : memref<1x32xf32, #tpu.memory_space<vmem>>, vector<1x32xf32>
    %42 = arith.mulf %25, %25 : vector<8x32xf32>
    %cst_18 = arith.constant dense<0.000000e+00> : vector<32xf32>
    %43 = vector.multi_reduction <add>, %42, %cst_18 [0] : vector<8x32xf32> to vector<32xf32>
    %44 = vector.shape_cast %43 : vector<32xf32> to vector<1x32xf32>
    %45 = arith.addf %41, %44 : vector<1x32xf32>
    %c0_19 = arith.constant 0 : index
    %c0_20 = arith.constant 0 : index
    %46 = vector.load %arg9[%c0_19, %c0_20] : memref<1x32xf32, #tpu.memory_space<vmem>>, vector<1x32xf32>
    tpu.vector_store %arg9[%c0_19, %c0_20], %45 {strides = array<i32>} : memref<1x32xf32, #tpu.memory_space<vmem>>, vector<1x32xf32>,
    %c0_i32_21 = arith.constant 0 : i32
    %47 = arith.cmpi eq, %arg1, %c0_i32_21 : i32
    %48 = arith.extui %47 : i1 to i32
    %c0_i32_22 = arith.constant 0 : i32
    %49 = arith.cmpi ne, %48, %c0_i32_22 : i32
    scf.if %49 {
      %c0_23 = arith.constant 0 : index
      %c0_24 = arith.constant 0 : index
      %50 = vector.load %arg7[%c0_23, %c0_24] : memref<8x32xf32, #tpu.memory_space<vmem>>, vector<8x32xf32>
      %c0_25 = arith.constant 0 : index
      %c0_26 = arith.constant 0 : index
      %c0_27 = arith.constant 0 : index
      %51 = vector.load %arg4[%c0_25, %c0_26, %c0_27] : memref<1x8x32xf32, #tpu.memory_space<vmem>>, vector<1x8x32xf32>
      %52 = vector.shape_cast %51 : vector<1x8x32xf32> to vector<8x32xf32>
      %53 = vector.shape_cast %50 : vector<8x32xf32> to vector<1x8x32xf32>
      tpu.vector_store %arg4[%c0_25, %c0_26, %c0_27], %53 {strides = array<i32>} : memref<1x8x32xf32, #tpu.memory_space<vmem>>, vector<1x8x32xf32>,
      %c0_28 = arith.constant 0 : index
      %c0_29 = arith.constant 0 : index
      %54 = vector.load %arg8[%c0_28, %c0_29] : memref<1x8xf32, #tpu.memory_space<vmem>>, vector<1x8xf32>
      %c0_30 = arith.constant 0 : index
      %c0_31 = arith.constant 0 : index
      %c0_32 = arith.constant 0 : index
      %55 = vector.load %arg5[%c0_30, %c0_31, %c0_32] : memref<1x1x8xf32, #tpu.memory_space<vmem>>, vector<1x1x8xf32>
      %56 = vector.shape_cast %55 : vector<1x1x8xf32> to vector<1x8xf32>
      %57 = vector.shape_cast %54 : vector<1x8xf32> to vector<1x1x8xf32>
      tpu.vector_store %arg5[%c0_30, %c0_31, %c0_32], %57 {strides = array<i32>} : memref<1x1x8xf32, #tpu.memory_space<vmem>>, vector<1x1x8xf32>,
      %c0_33 = arith.constant 0 : index
      %c0_34 = arith.constant 0 : index
      %58 = vector.load %arg9[%c0_33, %c0_34] : memref<1x32xf32, #tpu.memory_space<vmem>>, vector<1x32xf32>
      %c0_35 = arith.constant 0 : index
      %c0_36 = arith.constant 0 : index
      %c0_37 = arith.constant 0 : index
      %59 = vector.load %arg6[%c0_35, %c0_36, %c0_37] : memref<1x1x32xf32, #tpu.memory_space<vmem>>, vector<1x1x32xf32>
      %60 = vector.shape_cast %59 : vector<1x1x32xf32> to vector<1x32xf32>
      %61 = vector.shape_cast %58 : vector<1x32xf32> to vector<1x1x32xf32>
      tpu.vector_store %arg6[%c0_35, %c0_36, %c0_37], %61 {strides = array<i32>} : memref<1x1x32xf32, #tpu.memory_space<vmem>>, vector<1x1x32xf32>,
    } else {
    }
    return
  }
  func.func @transform_0(%arg0: i32, %arg1: i32) -> (i32, i32) {
    %c1_i32 = arith.constant 1 : i32
    %0 = arith.muli %arg0, %c1_i32 : i32
    %1 = arith.addi %0, %arg1 : i32
    %c0_i32 = arith.constant 0 : i32
    %2 = arith.minsi %1, %c0_i32 : i32
    %c0_i32_0 = arith.constant 0 : i32
    %c0_i32_1 = arith.constant 0 : i32
    return %2, %c0_i32_0 : i32, i32
  }
  func.func @transform_1(%arg0: i32, %arg1: i32) -> (i32, i32) {
    %c1_i32 = arith.constant 1 : i32
    %0 = arith.muli %arg0, %c1_i32 : i32
    %1 = arith.addi %0, %arg1 : i32
    %c0_i32 = arith.constant 0 : i32
    %2 = arith.minsi %1, %c0_i32 : i32
    %c0_i32_0 = arith.constant 0 : i32
    %c0_i32_1 = arith.constant 0 : i32
    return %2, %c0_i32_0 : i32, i32
  }
  func.func @transform_2(%arg0: i32, %arg1: i32) -> (i32, i32, i32) {
    %c0_i32 = arith.constant 0 : i32
    %c0_i32_0 = arith.constant 0 : i32
    %c0_i32_1 = arith.constant 0 : i32
    return %arg0, %c0_i32, %c0_i32_0 : i32, i32, i32
  }
  func.func @transform_3(%arg0: i32, %arg1: i32) -> (i32, i32, i32) {
    %c0_i32 = arith.constant 0 : i32
    %c0_i32_0 = arith.constant 0 : i32
    %c0_i32_1 = arith.constant 0 : i32
    return %arg0, %c0_i32, %c0_i32_0 : i32, i32, i32
  }
  func.func @transform_4(%arg0: i32, %arg1: i32) -> (i32, i32, i32) {
    %c0_i32 = arith.constant 0 : i32
    %c0_i32_0 = arith.constant 0 : i32
    %c0_i32_1 = arith.constant 0 : i32
    return %arg0, %c0_i32, %c0_i32_0 : i32, i32, i32
  }
}

</mosaic_0001>

<llo_original>
// kernel: center_loss.1
$region0: #{center_loss.1}
  #allocation0 [shape = 'u32[]', space=smem, size = 0x4, offset = 0x4, fixed_abs, tag = 'smem constant byte address 0x4 - core index']
  #allocation1 [shape = 'u32[144,128]{1,0:T(1,128)}', space=vmem, size = 0x12000, scoped, tag = 'internal scratch']
  #allocation2 [shape = 'f32[8,32]{1,0:T(8,128)}', space=vmem, size = 0x1000, scoped, tag = 'scratch operand']
  #allocation3 [shape = 'f32[1,8]{1,0:T(1,128)}', space=vmem, size = 0x200, scoped, tag = 'scratch operand']
  #allocation4 [shape = 'f32[1,32]{1,0:T(1,128)}', space=vmem, size = 0x200, scoped, tag = 'scratch operand']
  %s0 = inlined_call_operand.vmem [shape: f32[8,32], index: 0, kind: input, shape index: {}]
  %s1 = inlined_call_operand.vmem [shape: s32[8,1], index: 1, kind: input, shape index: {}]
  %s2 = inlined_call_operand.vmem [shape: f32[1,8,32], index: 2, kind: output, shape index: {0}]
  %s3 = inlined_call_operand.vmem [shape: f32[1,1,8], index: 3, kind: output, shape index: {1}]
  %s4 = inlined_call_operand.vmem [shape: f32[1,1,32], index: 4, kind: output, shape index: {2}]
  %5 = xla_tuple %s2, %s3, %s4
  %s6 = sld [smem:[#allocation0]]
  $region42: #{center_loss.1} parent=0
    _
  %s8 = ssub.s32 1, %s6
  %s9 = scalar_select 0, %s8, %s6
  // Predicated region
  $region2: #{center_loss.1} parent=0 // pred_check
    _
  $region3: #{center_loss.1} parent=0 // pred_check_branch
    %11 = sbr.rel (0) target = $region5
  $region4: #{center_loss.1} parent=0 // pred_region
    %s12 = sadd.s32 0, 0
    %p13 = scmp.lt.s32.totalorder %s12, 0
    %s14 = scalar_select %p13, %s12, 0
    %p15 = scmp.lt.s32.totalorder %s14, 0
    %s16 = scalar_select %p15, %s14, 0
    %s17 = smul.addr %s16, 8
    %s18 = scalar_lea.vmem %s0, %s17
    %s19 = sadd.s32 0, 0
    %p20 = scmp.lt.s32.totalorder %s19, 0
    %s21 = scalar_select %p20, %s19, 0
  $region5: #{center_loss.1} parent=0 // pred_fallthru
    _
  // Predicated region
  $region6: #{center_loss.1} parent=0 // pred_check
    _
  $region7: #{center_loss.1} parent=0 // pred_check_branch
    %23 = sbr.rel (0) target = $region9
  $region8: #{center_loss.1} parent=0 // pred_region
    %s24 = sadd.s32 0, 0
    %p25 = scmp.lt.s32.totalorder %s24, 0
    %s26 = scalar_select %p25, %s24, 0
    %p27 = scmp.lt.s32.totalorder %s26, 0
    %s28 = scalar_select %p27, %s26, 0
    %s29 = smul.addr %s28, 8
    %s30 = scalar_lea.vmem %s1, %s29
    %s31 = sadd.s32 0, 0
    %p32 = scmp.lt.s32.totalorder %s31, 0
    %s33 = scalar_select %p32, %s31, 0
  $region9: #{center_loss.1} parent=0 // pred_fallthru
    _
  %s34 = sadd.s32 0, 0
  %p35 = scmp.lt.s32.totalorder %s34, 0
  %s36 = scalar_select %p35, %s34, 0
  %p37 = scmp.lt.s32.totalorder %s36, 0
  %s38 = scalar_select %p37, %s36, 0
  %s39 = smul.addr %s38, 8
  %s40 = scalar_lea.vmem %s0, %s39
  %s41 = sadd.s32 0, 0
  %p42 = scmp.lt.s32.totalorder %s41, 0
  %s43 = scalar_select %p42, %s41, 0
  %p44 = scmp.lt.s32.totalorder %s43, 0
  %s45 = scalar_select %p44, %s43, 0
  %s46 = smul.addr %s45, 8
  %s47 = scalar_lea.vmem %s1, %s46
  %s48 = sadd.s32 0, 0
  %p49 = scmp.lt.s32.totalorder %s48, 0
  %s50 = scalar_select %p49, %s48, 0
  %p51 = scmp.lt.s32.totalorder %s50, 0
  %s52 = scalar_select %p51, %s50, 0
  %s53 = smul.addr %s52, 8
  %s54 = scalar_lea.vmem %s0, %s53
  %s55 = sadd.s32 0, 0
  %p56 = scmp.lt.s32.totalorder %s55, 0
  %s57 = scalar_select %p56, %s55, 0
  %s58 = sadd.s32 0, 0
  %p59 = scmp.lt.s32.totalorder %s58, 0
  %s60 = scalar_select %p59, %s58, 0
  %p61 = scmp.lt.s32.totalorder %s60, 0
  %s62 = scalar_select %p61, %s60, 0
  %s63 = smul.addr %s62, 8
  %s64 = scalar_lea.vmem %s1, %s63
  %s65 = sadd.s32 0, 0
  %p66 = scmp.lt.s32.totalorder %s65, 0
  %s67 = scalar_select %p66, %s65, 0
  %p69 = scmp.eq.s32.totalorder 0, 0
  // Predicated region
  $region10: #{center_loss.1} parent=0 // pred_check
    %p70 = pneg %p69
  $region11: #{center_loss.1} parent=0 // pred_check_branch
    %72 = sbr.rel (%p70) target = $region13
  $region12: #{center_loss.1} parent=0 // pred_region
    %vm73 = vcmask 261120
    %74 = vst.msk [vmem:[#allocation2] sm:$0xff] %vm73, 0.0
    %vm75 = vcmask 57344
    %76 = vst.msk [vmem:[#allocation3] sm:$0x1] %vm75, 0.0
    %vm77 = vcmask 253952
    %78 = vst.msk [vmem:[#allocation4] sm:$0x1] %vm77, 0.0
  $region13: #{center_loss.1} parent=0 // pred_fallthru
    _
  %s79 = sadd.s32 0, 0
  %s80 = smul.u32 %s79, 8
  %v81 = vlaneseq
  %v82 = vshrl.u32 %v81, 7
  %v83 = vstv %s80
  %v84 = vadd.s32 %v83, %v82
  %vm85 = vcmp.lt.s32.totalorder %v84, 8
  %v86 = vld [vmem:[%s64] sm:$0xff]
  %v87 = vlaneseq
  %v88 = vand.u32 %v87, 127
  %89 = vset.pattern.permute.xlu0 0
  %90 = vperm.xlu0 %89, %v86
  %v91 = vpop.permute.xlu0 %90
  %vm92 = vcmp.eq.s32.totalorder %v91, %v88
  %v93 = vsel %vm85, 1, 0
  %vm94 = vcmp.eq.s32.totalorder %v93, 1
  %vm95 = vmand %vm92, %vm94
  %v96 = vsel %vm95, 1, 0
  %v97 = vcvt.s32.f32 %v96
  %v98 = vpack.c.bf16 %v97, %v97
  %v99 = vld [vmem:[%s54] sm:$0xff]
  %v100 = vsel %vm94, %v99, 0.0
  %v101 = vpack.c.bf16 %v100, %v100
  %v102 = vunpack.c.l.bf16 %v101
  %v103 = vsub.f32 %v100, %v102
  %v104 = vpack.c.bf16 %v103, %v103
  %105 = vxpose.xlu0.c.b16.start [1/8] %v98, 128
  %106 = vxpose.xlu0.c.b16.cont [2/8] 0, 128
  %107 = vxpose.xlu0.c.b16.cont [3/8] 0, 128
  %108 = vxpose.xlu0.c.b16.cont [4/8] 0, 128
  %109 = vxpose.xlu0.c.b16.cont [5/8] 0, 128
  %110 = vxpose.xlu0.c.b16.cont [6/8] 0, 128
  %111 = vxpose.xlu0.c.b16.cont [7/8] 0, 128
  %112 = vxpose.xlu0.c.b16.end [8/8] 0, 128
  %v113 = vpop.trf.xlu0
  %v114 = vpop.trf.xlu0
  %v115 = vpop.trf.xlu0
  %v116 = vpop.trf.xlu0
  %v117 = vpop.trf.xlu0
  %v118 = vpop.trf.xlu0
  %v119 = vpop.trf.xlu0
  %v120 = vpop.trf.xlu0
  %vm121 = vcmask 64512
  %v123 = vsel %vm121, %v113, 0
  %vm125 = vcmask 1043456
  %v127 = vsel %vm125, %v104, 0
  %129 = vmatprep.subr.bf16.mxu0 0
  %130 = vmatpush1.bf16.msra.mxu0 %v127
  %131 = vmatprep.subr.bf16.mxu0 0
  %132 = vmatpush1.bf16.msra.mxu0 0
  %133 = vmatprep.subr.bf16.mxu0 0
  %134 = vmatpush1.bf16.msra.mxu0 0
  %135 = vmatprep.subr.bf16.mxu0 0
  %136 = vmatpush1.bf16.msra.mxu0 0
  %137 = vmatprep.subr.bf16.mxu0 0
  %138 = vmatpush1.bf16.msra.mxu0 0
  %139 = vmatprep.subr.bf16.mxu0 0
  %140 = vmatpush1.bf16.msra.mxu0 0
  %141 = vmatprep.subr.bf16.mxu0 0
  %142 = vmatpush1.bf16.msra.mxu0 0
  %143 = vmatprep.subr.bf16.mxu0 0
  %144 = vmatpush1.bf16.msra.mxu0 0
  %145 = vmatprep.subr.bf16.mxu0 0
  %146 = vmatpush1.bf16.msra.mxu0 0
  %147 = vmatprep.subr.bf16.mxu0 0
  %148 = vmatpush1.bf16.msra.mxu0 0
  %149 = vmatprep.subr.bf16.mxu0 0
  %150 = vmatpush1.bf16.msra.mxu0 0
  %151 = vmatprep.subr.bf16.mxu0 0
  %152 = vmatpush1.bf16.msra.mxu0 0
  %153 = vmatprep.subr.bf16.mxu0 0
  %154 = vmatpush1.bf16.msra.mxu0 0
  %155 = vmatprep.subr.bf16.mxu0 0
  %156 = vmatpush1.bf16.msra.mxu0 0
  %157 = vmatprep.subr.bf16.mxu0 0
  %158 = vmatpush1.bf16.msra.mxu0 0
  %159 = vmatprep.subr.bf16.mxu0 0
  %160 = vmatpush1.bf16.msra.mxu0 0
  %161 = vmatprep.mubr.bf16.mxu0 0
  %162 = vmatmul.mubr.bf16.gmra.mrb[0].mxu0 %v123
  %v163 = vpop.f32.mrb[0].mxu0
  %v164 = vadd.f32 0.0, %v163
  %v165 = vpop.f32.mrb[0].mxu0
  %v166 = vpop.f32.mrb[0].mxu0
  %v167 = vpop.f32.mrb[0].mxu0
  %168 = vdwg.mxu0
  %v170 = vsel %vm125, %v101, 0
  %172 = vmatprep.subr.bf16.mxu0 0
  %173 = vmatpush1.bf16.msra.mxu0 %v170
  %174 = vmatprep.subr.bf16.mxu0 0
  %175 = vmatpush1.bf16.msra.mxu0 0
  %176 = vmatprep.subr.bf16.mxu0 0
  %177 = vmatpush1.bf16.msra.mxu0 0
  %178 = vmatprep.subr.bf16.mxu0 0
  %179 = vmatpush1.bf16.msra.mxu0 0
  %180 = vmatprep.subr.bf16.mxu0 0
  %181 = vmatpush1.bf16.msra.mxu0 0
  %182 = vmatprep.subr.bf16.mxu0 0
  %183 = vmatpush1.bf16.msra.mxu0 0
  %184 = vmatprep.subr.bf16.mxu0 0
  %185 = vmatpush1.bf16.msra.mxu0 0
  %186 = vmatprep.subr.bf16.mxu0 0
  %187 = vmatpush1.bf16.msra.mxu0 0
  %188 = vmatprep.subr.bf16.mxu0 0
  %189 = vmatpush1.bf16.msra.mxu0 0
  %190 = vmatprep.subr.bf16.mxu0 0
  %191 = vmatpush1.bf16.msra.mxu0 0
  %192 = vmatprep.subr.bf16.mxu0 0
  %193 = vmatpush1.bf16.msra.mxu0 0
  %194 = vmatprep.subr.bf16.mxu0 0
  %195 = vmatpush1.bf16.msra.mxu0 0
  %196 = vmatprep.subr.bf16.mxu0 0
  %197 = vmatpush1.bf16.msra.mxu0 0
  %198 = vmatprep.subr.bf16.mxu0 0
  %199 = vmatpush1.bf16.msra.mxu0 0
  %200 = vmatprep.subr.bf16.mxu0 0
  %201 = vmatpush1.bf16.msra.mxu0 0
  %202 = vmatprep.subr.bf16.mxu0 0
  %203 = vmatpush1.bf16.msra.mxu0 0
  %204 = vmatprep.mubr.bf16.mxu0 0
  %205 = vmatmul.mubr.bf16.gmra.mrb[0].mxu0 %v123
  %v206 = vpop.f32.mrb[0].mxu0
  %v207 = vadd.f32 %v164, %v206
  %v208 = vpop.f32.mrb[0].mxu0
  %v209 = vpop.f32.mrb[0].mxu0
  %v210 = vpop.f32.mrb[0].mxu0
  %211 = vdwg.mxu0
  %v212 = vld [vmem:[#allocation2] sm:$0xff]
  %v213 = vadd.f32 %v212, %v207
  %vm214 = vcmask 261120
  %215 = vst.msk [vmem:[#allocation2] sm:$0xff] %vm214, %v213
  %v216 = vld [vmem:[#allocation3] sm:$0x1]
  %v217 = vsel %vm121, %v97, 0.0
  %v218 = vrot.slane %v217, 4
  %v219 = vadd.f32 %v217, %v218
  %v220 = vrot.slane %v219, 2
  %v221 = vadd.f32 %v219, %v220
  %v222 = vrot.slane %v221, 1
  %v223 = vadd.f32 %v221, %v222
  %v224 = vadd.f32 %v216, %v223
  %vm225 = vcmask 57344
  %226 = vst.msk [vmem:[#allocation3] sm:$0x1] %vm225, %v224
  %v227 = vld [vmem:[#allocation4] sm:$0x1]
  %v228 = vmul.f32 %v100, %v100
  %v229 = vsel %vm214, %v228, 0.0
  %v230 = vrot.slane %v229, 4
  %v231 = vadd.f32 %v229, %v230
  %v232 = vrot.slane %v231, 2
  %v233 = vadd.f32 %v231, %v232
  %v234 = vrot.slane %v233, 1
  %v235 = vadd.f32 %v233, %v234
  %v236 = vadd.f32 %v227, %v235
  %vm237 = vcmask 253952
  %238 = vst.msk [vmem:[#allocation4] sm:$0x1] %vm237, %v236
  // Predicated region
  $region14: #{center_loss.1} parent=0 // pred_check
    %p239 = pneg %p69
  $region15: #{center_loss.1} parent=0 // pred_check_branch
    %241 = sbr.rel (%p239) target = $region17
  $region16: #{center_loss.1} parent=0 // pred_region
    %v242 = vld [vmem:[#allocation2] sm:$0xff]
    %243 = vst.msk [vmem:[%s2] sm:$0xff] %vm214, %v242
    %v244 = vld [vmem:[#allocation3] sm:$0x1]
    %245 = vst.msk [vmem:[%s3] sm:$0x1] %vm225, %v244
    %v246 = vld [vmem:[#allocation4] sm:$0x1]
    %247 = vst.msk [vmem:[%s4] sm:$0x1] %vm237, %v246
  $region17: #{center_loss.1} parent=0 // pred_fallthru
    _
  // Predicated region
  $region18: #{center_loss.1} parent=0 // pred_check
    _
  $region19: #{center_loss.1} parent=0 // pred_check_branch
    %249 = sbr.rel (0) target = $region21
  $region20: #{center_loss.1} parent=0 // pred_region
    _
  $region21: #{center_loss.1} parent=0 // pred_fallthru
    _
  // Predicated region
  $region22: #{center_loss.1} parent=0 // pred_check
    _
  $region23: #{center_loss.1} parent=0 // pred_check_branch
    %251 = sbr.rel (0) target = $region25
  $region24: #{center_loss.1} parent=0 // pred_region
    _
  $region25: #{center_loss.1} parent=0 // pred_fallthru
    _
  // Predicated region
  $region26: #{center_loss.1} parent=0 // pred_check
    _
  $region27: #{center_loss.1} parent=0 // pred_check_branch
    %253 = sbr.rel (0) target = $region29
  $region28: #{center_loss.1} parent=0 // pred_region
    _
  $region29: #{center_loss.1} parent=0 // pred_fallthru
    _
  // Predicated region
  $region30: #{center_loss.1} parent=0 // pred_check
    _
  $region31: #{center_loss.1} parent=0 // pred_check_branch
    %255 = sbr.rel (0) target = $region33
  $region32: #{center_loss.1} parent=0 // pred_region
    _
  $region33: #{center_loss.1} parent=0 // pred_fallthru
    _
  // Predicated region
  $region34: #{center_loss.1} parent=0 // pred_check
    _
  $region35: #{center_loss.1} parent=0 // pred_check_branch
    %257 = sbr.rel (0) target = $region37
  $region36: #{center_loss.1} parent=0 // pred_region
    _
  $region37: #{center_loss.1} parent=0 // pred_fallthru
    _
  // Predicated region
  $region38: #{center_loss.1} parent=0 // pred_check
    _
  $region39: #{center_loss.1} parent=0 // pred_check_branch
    %259 = sbr.rel (0) target = $region41
  $region40: #{center_loss.1} parent=0 // pred_region
    _
  $region41: #{center_loss.1} parent=0 // pred_fallthru
    _

</llo_original>
